<compile_context>
chip_gen: v6e
topology: v6e:2x2x1
jax: 0.10.0
libtpu: 0.0.40
codegen_flags: <defaults>
</compile_context>

<pallas_src>
import jax
import jax.numpy as jnp
from jax.experimental import pallas as pl
from jax.experimental.pallas import tpu as pltpu


def _vmem_capacity_bytes() -> int:
    """Per-core VMEM capacity, with a conservative fallback (v7x = 64 MiB per TC)."""
    try:
        cap = int(pltpu.get_tpu_info().vmem_capacity_bytes)
    except Exception:
        cap = 64 * 1024 * 1024
    # sanity clamp
    return max(32 * 1024 * 1024, min(cap, 128 * 1024 * 1024))


def _choose_l_tile(L: int, C: int, bytes_per_l: int, vmem_limit: int) -> int:
    """Largest lane-aligned L tile whose double-buffered input footprint fits the budget.

    bytes_per_l = C * (pred_itemsize + target_itemsize)  -> bytes both streams read per
    L position.  Footprint ~= 2 pipeline buffers * tile * bytes_per_l; budget leaves half of
    vmem_limit as headroom for the output blocks, the (C, C) matmul intermediate and compiler
    scratch.
    """
    if L <= 128:
        return L                     # single full-extent block; trivially fits
    budget = vmem_limit // 2
    cands = (8192, 4096, 2048, 1024, 512, 256, 128)

    def fits(t):
        return 2 * t * bytes_per_l <= budget

    for t in cands:                  # prefer exact divisors of L: no masked last tile
        if t <= L and L % t == 0 and fits(t):
            return t
    for t in cands:                  # otherwise largest aligned tile <= L; mask the last tile
        if t <= L and fits(t):
            return t
    return 128


def _make_kernel(L: int, tl: int, C: int, needs_mask: bool):
    """One (batch b, l-tile) grid step.

    pred_ref : (tl, C)  logits tile  pred[b, l0:l0+tl, :]
    tgt_ref  : (C, tl)  target tile  target[b, :, l0:l0+tl]   (lane-dense)
    out_ref  : (1, 1)   per-batch partial loss SUM (written at the last l-tile)
    acc_ref  : (1, 1)   f32 running scalar accumulator (VMEM scratch)
    """

    def kernel(pred_ref, tgt_ref, out_ref, acc_ref):
        lt = pl.program_id(1)

        @pl.when(lt == 0)
        def _init():
            acc_ref[...] = jnp.zeros_like(acc_ref)

        x = pred_ref[...].astype(jnp.float32)   # (tl, C)
        y = tgt_ref[...].astype(jnp.float32)    # (C, tl)

        # stable softplus(x) = max(x,0) + log1p(exp(-|x|));  BCE(x, y) = softplus(x) - x*y
        sp = jnp.maximum(x, 0.0) + jnp.log1p(jnp.exp(-jnp.abs(x)))

        if needs_mask:
            # Last tile may extend past L: mask the garbage region (exact mean divisor is
            # applied in the wrapper).  Both operands of the matmul are zeroed so stale
            # inf/NaN VMEM garbage cannot poison the MXU accumulation.
            valid = L - lt * tl                  # >= tl on all but the last tile
            lrow = jax.lax.broadcasted_iota(jnp.int32, (tl, C), 0)
            lcol = jax.lax.broadcasted_iota(jnp.int32, (C, tl), 1)
            sp = jnp.where(lrow < valid, sp, 0.0)
            x = jnp.where(lrow < valid, x, 0.0)
            y = jnp.where(lcol < valid, y, 0.0)

        # Cross term sum_{l,c} x[l,c]*y[c,l] == trace(y @ x): the (B,L,C)<->(B,C,L) permute is
        # fused via the otherwise-idle MXU -- no wrapper transpose, no in-kernel relayout,
        # each input read from HBM exactly once.
        prod = jnp.dot(y, x, preferred_element_type=jnp.float32)   # (C, C)
        r = jax.lax.broadcasted_iota(jnp.int32, (C, C), 0)
        c = jax.lax.broadcasted_iota(jnp.int32, (C, C), 1)
        cross = jnp.sum(jnp.where(r == c, prod, 0.0))

        # Single scalar RMW per tile (replaces the old full (tl, C) accumulator).
        acc_ref[...] += jnp.sum(sp) - cross

        @pl.when(lt == pl.num_programs(1) - 1)
        def _finalize():
            out_ref[...] = acc_ref[...]

    return kernel


def bce_with_logits_loss(pred, target):
    """pred: (B, L, C) logits; target: (B, C, L) in [0, 1]. Returns scalar f32 mean loss."""
    B, L, C = pred.shape
    assert target.shape == (B, C, L), "target must match permuted pred shape (B, C, L)"

    cap = _vmem_capacity_bytes()
    vmem_limit = (3 * cap) // 4
    bytes_per_l = C * (jnp.dtype(pred.dtype).itemsize + jnp.dtype(target.dtype).itemsize)
    tl = _choose_l_tile(L, C, bytes_per_l, vmem_limit)
    n_l = pl.cdiv(L, tl)
    needs_mask = (L % tl) != 0

    partial = pl.pallas_call(
        _make_kernel(L, tl, C, needs_mask),
        out_shape=jax.ShapeDtypeStruct((B, 1, 1), jnp.float32),   # per-batch loss sums
        grid_spec=pltpu.PrefetchScalarGridSpec(
            num_scalar_prefetch=0,
            grid=(B, n_l),
            in_specs=[
                # pred (B, L, C): squeeze batch, tile L (sublane dim), full C.
                pl.BlockSpec((None, tl, C), lambda b, l: (b, l, 0)),
                # target (B, C, L): squeeze batch, full C, tile L (lane-dense, 128-aligned).
                pl.BlockSpec((None, C, tl), lambda b, l: (b, 0, l)),
            ],
            out_specs=pl.BlockSpec((None, 1, 1), lambda b, l: (b, 0, 0)),
            scratch_shapes=[pltpu.VMEM((1, 1), jnp.float32)],     # scalar loss accumulator
        ),
        compiler_params=pltpu.CompilerParams(
            # batch axis independent (megacore-shardable), l-tile reduction axis sequential.
            dimension_semantics=("parallel", "arbitrary"),
            vmem_limit_bytes=int(vmem_limit),
        ),
    )(pred, target)

    total = B * C * L                          # reduction='mean' over ALL elements
    return jnp.sum(partial) / jnp.float32(total)


if __name__ == "__main__":
    key = jax.random.PRNGKey(0)
    k1, k2, k3, k4 = jax.random.split(key, 4)

    def reference(pred, target):
        # Pure-JAX reference of torch.nn.BCEWithLogitsLoss()(pred.permute(0,2,1), target).
        xp = jnp.transpose(pred, (0, 2, 1)).astype(jnp.float32)
        t = target.astype(jnp.float32)
        return jnp.mean(jnp.maximum(xp, 0.0) - xp * t + jnp.log1p(jnp.exp(-jnp.abs(xp))))

    # 1) Small shapes consistent with the module: (B, L, C) logits / (B, C, L) targets.
    B, L, C = 2, 8, 4
    pred = jax.random.normal(k1, (B, L, C), dtype=jnp.float32)
    target = jax.random.bernoulli(k2, 0.5, (B, C, L)).astype(jnp.float32)
    loss = bce_with_logits_loss(pred, target)
    jax.block_until_ready(loss)
    ref = reference(pred, target)
    # Tolerance absorbs MXU multi-pass f32 rounding of the in-kernel cross-term matmul.
    assert jnp.allclose(loss, ref, atol=5e-4, rtol=5e-4), (loss, ref)

    # 2) Non-128-divisible L spanning several tiles: exercises multi-tile accumulation and the
    #    masked last tile.
    B2, L2, C2 = 2, 200, 4
    pred2 = jax.random.normal(k3, (B2, L2, C2), dtype=jnp.float32)
    target2 = jax.random.bernoulli(k4, 0.5, (B2, C2, L2)).astype(jnp.float32)
    loss2 = bce_with_logits_loss(pred2, target2)
    jax.block_until_ready(loss2)
    ref2 = reference(pred2, target2)
    assert jnp.allclose(loss2, ref2, atol=5e-4, rtol=5e-4), (loss2, ref2)

    print("KERNEL_OK")
</pallas_src>

<mosaic_0001>
module attributes {stable_mosaic.version = 11 : i64} {
  func.func @kernel(%arg0: i32, %arg1: i32, %arg2: memref<1x8x4xf32, #tpu.memory_space<vmem>>, %arg3: memref<1x4x8xf32, #tpu.memory_space<vmem>>, %arg4: memref<1x1x1xf32, #tpu.memory_space<vmem>>, %arg5: memref<1x1xf32, #tpu.memory_space<vmem>>) attributes {dimension_semantics = [#tpu.dimension_semantics<parallel>, #tpu.dimension_semantics<arbitrary>], iteration_bounds = array<i64: 2, 1>, scalar_prefetch = 0 : i64, scratch_operands = 1 : i64, tpu.core_type = #tpu.core_type<tc>, window_params = [{transform_indices = @transform_0, window_bounds = array<i64: 1, 8, 4>}, {transform_indices = @transform_1, window_bounds = array<i64: 1, 4, 8>}, {transform_indices = @transform_2, window_bounds = array<i64: 1, 1, 1>}]} {
    %c0_i32 = arith.constant 0 : i32
    %0 = arith.cmpi eq, %arg1, %c0_i32 : i32
    %1 = arith.extui %0 : i1 to i32
    %c0_i32_0 = arith.constant 0 : i32
    %2 = arith.cmpi ne, %1, %c0_i32_0 : i32
    scf.if %2 {
      %cst_17 = arith.constant 0.000000e+00 : f32
      %37 = vector.broadcast %cst_17 : f32 to vector<1x1xf32>
      %c0_18 = arith.constant 0 : index
      %c0_19 = arith.constant 0 : index
      %38 = vector.load %arg5[%c0_18, %c0_19] : memref<1x1xf32, #tpu.memory_space<vmem>>, vector<1x1xf32>
      tpu.vector_store %arg5[%c0_18, %c0_19], %37 {strides = array<i32>} : memref<1x1xf32, #tpu.memory_space<vmem>>, vector<1x1xf32>,
    } else {
    }
    %c0 = arith.constant 0 : index
    %c0_1 = arith.constant 0 : index
    %c0_2 = arith.constant 0 : index
    %3 = vector.load %arg2[%c0, %c0_1, %c0_2] : memref<1x8x4xf32, #tpu.memory_space<vmem>>, vector<1x8x4xf32>
    %4 = vector.shape_cast %3 : vector<1x8x4xf32> to vector<8x4xf32>
    %c0_3 = arith.constant 0 : index
    %c0_4 = arith.constant 0 : index
    %c0_5 = arith.constant 0 : index
    %5 = vector.load %arg3[%c0_3, %c0_4, %c0_5] : memref<1x4x8xf32, #tpu.memory_space<vmem>>, vector<1x4x8xf32>
    %6 = vector.shape_cast %5 : vector<1x4x8xf32> to vector<4x8xf32>
    %cst = arith.constant 0.000000e+00 : f32
    %7 = vector.broadcast %cst : f32 to vector<8x4xf32>
    %8 = arith.maximumf %4, %7 : vector<8x4xf32>
    %9 = math.absf %4 : vector<8x4xf32>
    %cst_6 = arith.constant 0.000000e+00 : f32
    %10 = vector.broadcast %cst_6 : f32 to vector<8x4xf32>
    %11 = arith.subf %10, %9 : vector<8x4xf32>
    %12 = math.exp %11 : vector<8x4xf32>
    %13 = math.log1p %12 : vector<8x4xf32>
    %14 = arith.addf %8, %13 : vector<8x4xf32>
    %cst_7 = arith.constant dense<0.000000e+00> : vector<4x4xf32>
    %15 = tpu.matmul %6, %4, %cst_7 {dimension_numbers = #tpu.dot_dimension_numbers<[1], [0], [0], [1], [0, 0, 1, 1], [], []>} : vector<4x8xf32>, vector<8x4xf32>, vector<4x4xf32> -> vector<4x4xf32>
    %16 = tpu.iota {dimensions = array<i32: 0>} : vector<4x4xi32>
    %17 = tpu.iota {dimensions = array<i32: 1>} : vector<4x4xi32>
    %18 = arith.cmpi eq, %16, %17 : vector<4x4xi32>
    %cst_8 = arith.constant 0.000000e+00 : f32
    %19 = vector.broadcast %cst_8 : f32 to vector<4x4xf32>
    %20 = arith.select %18, %15, %19 : vector<4x4xi1>, vector<4x4xf32>
    %21 = vector.shape_cast %20 : vector<4x4xf32> to vector<1x4x4xf32>
    %cst_9 = arith.constant dense<0.000000e+00> : vector<1xf32>
    %22 = vector.multi_reduction <add>, %21, %cst_9 [1, 2] : vector<1x4x4xf32> to vector<1xf32>
    %23 = vector.shape_cast %22 : vector<1xf32> to vector<1x1x1xf32>
    %24 = vector.extract %23[0, 0, 0] : f32 from vector<1x1x1xf32>
    %c0_10 = arith.constant 0 : index
    %c0_11 = arith.constant 0 : index
    %25 = vector.load %arg5[%c0_10, %c0_11] : memref<1x1xf32, #tpu.memory_space<vmem>>, vector<1x1xf32>
    %26 = vector.shape_cast %14 : vector<8x4xf32> to vector<1x8x4xf32>
    %cst_12 = arith.constant dense<0.000000e+00> : vector<1xf32>
    %27 = vector.multi_reduction <add>, %26, %cst_12 [1, 2] : vector<1x8x4xf32> to vector<1xf32>
    %28 = vector.shape_cast %27 : vector<1xf32> to vector<1x1x1xf32>
    %29 = vector.extract %28[0, 0, 0] : f32 from vector<1x1x1xf32>
    %30 = arith.subf %29, %24 : f32
    %31 = vector.broadcast %30 : f32 to vector<1x1xf32>
    %32 = arith.addf %25, %31 : vector<1x1xf32>
    %c0_13 = arith.constant 0 : index
    %c0_14 = arith.constant 0 : index
    %33 = vector.load %arg5[%c0_13, %c0_14] : memref<1x1xf32, #tpu.memory_space<vmem>>, vector<1x1xf32>
    tpu.vector_store %arg5[%c0_13, %c0_14], %32 {strides = array<i32>} : memref<1x1xf32, #tpu.memory_space<vmem>>, vector<1x1xf32>,
    %c0_i32_15 = arith.constant 0 : i32
    %34 = arith.cmpi eq, %arg1, %c0_i32_15 : i32
    %35 = arith.extui %34 : i1 to i32
    %c0_i32_16 = arith.constant 0 : i32
    %36 = arith.cmpi ne, %35, %c0_i32_16 : i32
    scf.if %36 {
      %c0_17 = arith.constant 0 : index
      %c0_18 = arith.constant 0 : index
      %37 = vector.load %arg5[%c0_17, %c0_18] : memref<1x1xf32, #tpu.memory_space<vmem>>, vector<1x1xf32>
      %c0_19 = arith.constant 0 : index
      %c0_20 = arith.constant 0 : index
      %c0_21 = arith.constant 0 : index
      %38 = vector.load %arg4[%c0_19, %c0_20, %c0_21] : memref<1x1x1xf32, #tpu.memory_space<vmem>>, vector<1x1x1xf32>
      %39 = vector.shape_cast %38 : vector<1x1x1xf32> to vector<1x1xf32>
      %40 = vector.shape_cast %37 : vector<1x1xf32> to vector<1x1x1xf32>
      tpu.vector_store %arg4[%c0_19, %c0_20, %c0_21], %40 {strides = array<i32>} : memref<1x1x1xf32, #tpu.memory_space<vmem>>, vector<1x1x1xf32>,
    } else {
    }
    return
  }
  func.func @transform_0(%arg0: i32, %arg1: i32) -> (i32, i32, i32) {
    %c0_i32 = arith.constant 0 : i32
    %c0_i32_0 = arith.constant 0 : i32
    return %arg0, %arg1, %c0_i32 : i32, i32, i32
  }
  func.func @transform_1(%arg0: i32, %arg1: i32) -> (i32, i32, i32) {
    %c0_i32 = arith.constant 0 : i32
    %c0_i32_0 = arith.constant 0 : i32
    return %arg0, %c0_i32, %arg1 : i32, i32, i32
  }
  func.func @transform_2(%arg0: i32, %arg1: i32) -> (i32, i32, i32) {
    %c0_i32 = arith.constant 0 : i32
    %c0_i32_0 = arith.constant 0 : i32
    %c0_i32_1 = arith.constant 0 : i32
    return %arg0, %c0_i32, %c0_i32_0 : i32, i32, i32
  }
}

</mosaic_0001>

<llo_original>
// kernel: tpu_custom_call.1
$region0: #{tpu_custom_call.1}
  #allocation0 [shape = 'u32[]', space=smem, size = 0x4, offset = 0x4, fixed_abs, tag = 'smem constant byte address 0x4 - core index']
  #allocation1 [shape = 'u32[144,128]{1,0:T(1,128)}', space=vmem, size = 0x12000, scoped, tag = 'internal scratch']
  #allocation2 [shape = 'f32[1,1]{1,0:T(1,128)}', space=vmem, size = 0x200, scoped, tag = 'scratch operand']
  %s0 = inlined_call_operand.vmem [shape: f32[2,8,4], index: 0, kind: input, shape index: {}]
  %s1 = inlined_call_operand.vmem [shape: f32[2,4,8], index: 1, kind: input, shape index: {}]
  %s2 = inlined_call_operand.vmem [shape: f32[2,1,1], index: 2, kind: output, shape index: {}]
  %s3 = sld [smem:[#allocation0]]
  $region49: #{tpu_custom_call.1} parent=0
    _
  %s5 = ssub.s32 1, %s3
  %s6 = scalar_select 0, %s5, %s3
  loop: start=0, step=1, limit=4
  $region2: #{tpu_custom_call.1} parent=0 // loop_pre_header
    _
  $region3: #{tpu_custom_call.1} parent=0 // loop_header
    %s8 = sphi 0, %s12
    %p9 = scmp.ge.s32.totalorder %s8, 4
    %s15 = sphi 0, %s27
    %s16 = sphi 0, %s23
    %s17 = sphi 0, %s15
    %s18 = sphi 0, %s16
    %s19 = sphi 0, %s17
    %s20 = sphi 0, %s18
    %s32 = sphi 0, %s34
    %s35 = sphi 0, %s32
    %s36 = sphi 0, %s35
    %s52 = sphi 0, %s36
    %s60 = sphi 0, %s62
    %s63 = sphi 0, %s60
    %s64 = sphi 0, %s63
    %s80 = sphi 0, %s64
    %s86 = sphi 0, %s88
    %s89 = sphi 0, %s86
    %s90 = sphi 0, %s89
    %s106 = sphi 0, %s90
  $region4: #{tpu_custom_call.1} parent=0 // loop_header_branch
    %11 = sbr.rel (%p9) target = $region8
  $region5: #{tpu_custom_call.1} parent=0 // loop_body
    %s13 = ssub.s32 %s8, 1
    %s14 = ssub.s32 %s8, 2
    %s21 = sadd.s32 1, %s16
    %p22 = scmp.ge.s32.totalorder %s21, 1
    %s23 = scalar_select %p22, 0, %s21
    %s24 = sadd.s32 1, %s15
    %s25 = scalar_select %p22, %s24, %s15
    %p26 = scmp.ge.s32.totalorder %s25, 2
    %s27 = scalar_select %p26, 0, %s25
    %s28 = ssub.s32 %s15, %s27
    %s29 = ssub.s32 %s16, %s23
    %s30 = sor.u32 %s28, %s29
    %p31 = scmp.eq.s32.totalorder %s30, 0
    %s33 = sadd.s32 %s32, 1
    %s34 = scalar_select %p31, %s32, %s33
    %p37 = pneg %p31
    %p38 = scmp.eq.s32.totalorder %s8, 1
    %p39 = por %p37, %p38
    %p40 = scmp.ne.s32.totalorder %s32, %s35
    %p41 = scmp.eq.s32.totalorder %s8, 0
    %p42 = por %p40, %p41
    %p43 = scmp.ne.s32.totalorder %s32, %s35
    %p44 = scmp.eq.s32.totalorder %s13, 1
    %p45 = por %p43, %p44
    %p46 = scmp.ne.s32.totalorder %s35, %s36
    %p47 = scmp.eq.s32.totalorder %s13, 0
    %p48 = por %p46, %p47
    %p49 = scmp.ne.s32.totalorder %s35, %s36
    %p50 = scmp.eq.s32.totalorder %s14, 1
    %p51 = por %p49, %p50
    %p53 = scmp.ne.s32.totalorder %s36, %s52
    %p54 = scmp.eq.s32.totalorder %s14, 0
    %p55 = por %p53, %p54
    %s56 = ssub.s32 %s15, %s27
    %s57 = ssub.s32 %s16, %s23
    %s58 = sor.u32 %s56, %s57
    %p59 = scmp.eq.s32.totalorder %s58, 0
    %s61 = sadd.s32 %s60, 1
    %s62 = scalar_select %p59, %s60, %s61
    %p65 = pneg %p59
    %p66 = scmp.eq.s32.totalorder %s8, 1
    %p67 = por %p65, %p66
    %p68 = scmp.ne.s32.totalorder %s60, %s63
    %p69 = scmp.eq.s32.totalorder %s8, 0
    %p70 = por %p68, %p69
    %p71 = scmp.ne.s32.totalorder %s60, %s63
    %p72 = scmp.eq.s32.totalorder %s13, 1
    %p73 = por %p71, %p72
    %p74 = scmp.ne.s32.totalorder %s63, %s64
    %p75 = scmp.eq.s32.totalorder %s13, 0
    %p76 = por %p74, %p75
    %p77 = scmp.ne.s32.totalorder %s63, %s64
    %p78 = scmp.eq.s32.totalorder %s14, 1
    %p79 = por %p77, %p78
    %p81 = scmp.ne.s32.totalorder %s64, %s80
    %p82 = scmp.eq.s32.totalorder %s14, 0
    %p83 = por %p81, %p82
    %s84 = ssub.s32 %s15, %s27
    %p85 = scmp.eq.s32.totalorder %s84, 0
    %s87 = sadd.s32 %s86, 1
    %s88 = scalar_select %p85, %s86, %s87
    %p91 = pneg %p85
    %p92 = scmp.eq.s32.totalorder %s8, 1
    %p93 = por %p91, %p92
    %p94 = scmp.ne.s32.totalorder %s86, %s89
    %p95 = scmp.eq.s32.totalorder %s8, 0
    %p96 = por %p94, %p95
    %p97 = scmp.ne.s32.totalorder %s86, %s89
    %p98 = scmp.eq.s32.totalorder %s13, 1
    %p99 = por %p97, %p98
    %p100 = scmp.ne.s32.totalorder %s89, %s90
    %p101 = scmp.eq.s32.totalorder %s13, 0
    %p102 = por %p100, %p101
    %p103 = scmp.ne.s32.totalorder %s89, %s90
    %p104 = scmp.eq.s32.totalorder %s14, 1
    %p105 = por %p103, %p104
    %p107 = scmp.ne.s32.totalorder %s90, %s106
    %p108 = scmp.eq.s32.totalorder %s14, 0
    %p109 = por %p107, %p108
    %p110 = scmp.le.s32.totalorder 1, %s8
    %p111 = scmp.lt.s32.totalorder %s8, 3
    %p112 = pnand %p110, %p111
    %p113 = pneg %p112
    // Predicated region
    $region9: #{tpu_custom_call.1} parent=5 // pred_check
      _
    $region10: #{tpu_custom_call.1} parent=5 // pred_check_branch
      %115 = sbr.rel (%p112) target = $region12
    $region11: #{tpu_custom_call.1} parent=5 // pred_region
      %s116 = ssub.s32 %s8, 1
    $region12: #{tpu_custom_call.1} parent=5 // pred_fallthru
      _
    %p117 = scmp.lt.s32.totalorder %s8, 2
    // Predicated region
    $region13: #{tpu_custom_call.1} parent=5 // pred_check
      %p118 = pneg %p117
    $region14: #{tpu_custom_call.1} parent=5 // pred_check_branch
      %120 = sbr.rel (%p118) target = $region16
    $region15: #{tpu_custom_call.1} parent=5 // pred_region
      // Predicated region
      $region17: #{tpu_custom_call.1} parent=15 // pred_check
        %p121 = pneg %p42
      $region18: #{tpu_custom_call.1} parent=15 // pred_check_branch
        %123 = sbr.rel (%p121) target = $region20
      $region19: #{tpu_custom_call.1} parent=15 // pred_region
        %p124 = scmp.lt.s32.totalorder %s15, 1
        %s125 = scalar_select %p124, %s15, 1
        %p126 = scmp.lt.s32.totalorder %s16, 0
        %s127 = scalar_select %p126, %s16, 0
        %s128 = sadd.s32 %s127, %s125
        %s129 = smul.addr %s128, 8
        %s130 = scalar_lea.vmem %s0, %s129
      $region20: #{tpu_custom_call.1} parent=15 // pred_fallthru
        _
      // Predicated region
      $region21: #{tpu_custom_call.1} parent=15 // pred_check
        %p131 = pneg %p70
      $region22: #{tpu_custom_call.1} parent=15 // pred_check_branch
        %133 = sbr.rel (%p131) target = $region24
      $region23: #{tpu_custom_call.1} parent=15 // pred_region
        %p134 = scmp.lt.s32.totalorder %s15, 1
        %s135 = scalar_select %p134, %s15, 1
        %p136 = scmp.lt.s32.totalorder %s16, 0
        %s137 = scalar_select %p136, %s16, 0
        %s138 = sadd.s32 %s137, %s135
        %s139 = smul.addr %s138, 4
        %s140 = scalar_lea.vmem %s1, %s139
      $region24: #{tpu_custom_call.1} parent=15 // pred_fallthru
        _
    $region16: #{tpu_custom_call.1} parent=5 // pred_fallthru
      _
    %p141 = scmp.le.s32.totalorder 1, %s8
    %p142 = scmp.lt.s32.totalorder %s8, 3
    %p143 = pnand %p141, %p142
    %p144 = pneg %p143
    // Predicated region
    $region25: #{tpu_custom_call.1} parent=5 // pred_check
      _
    $region26: #{tpu_custom_call.1} parent=5 // pred_check_branch
      %146 = sbr.rel (%p143) target = $region28
    $region27: #{tpu_custom_call.1} parent=5 // pred_region
      %s147 = ssub.s32 %s8, 1
      %p148 = scmp.lt.s32.totalorder %s17, 1
      %s149 = scalar_select %p148, %s17, 1
      %p150 = scmp.lt.s32.totalorder %s18, 0
      %s151 = scalar_select %p150, %s18, 0
      %s152 = sadd.s32 %s151, %s149
      %s153 = smul.addr %s152, 8
      %s154 = scalar_lea.vmem %s0, %s153
      %p155 = pneg %p48
      %p156 = pneg %p45
      %p157 = scmp.lt.s32.totalorder %s17, 1
      %s158 = scalar_select %p157, %s17, 1
      %p159 = scmp.lt.s32.totalorder %s18, 0
      %s160 = scalar_select %p159, %s18, 0
      %s161 = sadd.s32 %s160, %s158
      %s162 = smul.addr %s161, 4
      %s163 = scalar_lea.vmem %s1, %s162
      %p164 = pneg %p76
      %p165 = pneg %p73
      %p166 = pneg %p102
      %p167 = pneg %p99
      %p168 = scmp.lt.s32.totalorder %s17, 1
      %s169 = scalar_select %p168, %s17, 1
      %s170 = scalar_lea.vmem %s2, %s169
      %p171 = scmp.lt.s32.totalorder %s17, 1
      %s172 = scalar_select %p171, %s17, 1
      %p173 = scmp.lt.s32.totalorder %s18, 0
      %s174 = scalar_select %p173, %s18, 0
      %s175 = sadd.s32 %s174, %s172
      %s176 = smul.addr %s175, 8
      %s177 = scalar_lea.vmem %s0, %s176
      %p178 = scmp.lt.s32.totalorder %s17, 1
      %s179 = scalar_select %p178, %s17, 1
      %p180 = scmp.lt.s32.totalorder %s18, 0
      %s181 = scalar_select %p180, %s18, 0
      %s182 = sadd.s32 %s181, %s179
      %s183 = smul.addr %s182, 4
      %s184 = scalar_lea.vmem %s1, %s183
      %p185 = scmp.lt.s32.totalorder %s17, 1
      %s186 = scalar_select %p185, %s17, 1
      %s187 = scalar_lea.vmem %s2, %s186
      %p188 = scmp.eq.s32.totalorder %s18, 0
      // Predicated region
      $region29: #{tpu_custom_call.1} parent=27 // pred_check
        %p189 = pneg %p188
      $region30: #{tpu_custom_call.1} parent=27 // pred_check_branch
        %191 = sbr.rel (%p189) target = $region32
      $region31: #{tpu_custom_call.1} parent=27 // pred_region
        %vm192 = vcmask 0
        %193 = vst.msk [vmem:[#allocation2] sm:$0x1] %vm192, 0.0
      $region32: #{tpu_custom_call.1} parent=27 // pred_fallthru
        _
      %v194 = vld [vmem:[%s177] sm:$0xff]
      %v195 = vld [vmem:[%s184] sm:$0xf]
      %v196 = vmax.f32 %v194, 0.0
      %v197 = vand.u32 2147483647, %v194
      %v198 = vsub.f32 0.0, %v197
      %v199 = vmul.f32 %v198, 1.442695
      %v200 = vpow.pop %v199
      %v201 = vadd.f32 %v200, 1.0
      %v202 = vlog2.pop %v201
      %v203 = vmul.f32 %v202, 0.6931472
      %v204 = vmul.f32 -0.5, %v200
      %v205 = vadd.f32 %v204, 1.0
      %v206 = vmul.f32 %v205, %v200
      %v207 = vand.u32 2147483647, %v200
      %vm208 = vcmp.lt.f32.partialorder %v207, 0.0004427343
      %v209 = vsel %vm208, %v206, %v203
      %v210 = vadd.f32 %v196, %v209
      %vm211 = vcmask 64512
      %v213 = vsel %vm211, %v195, 0
      %215 = vmatprep.subr.mxu0 0.0
      %216 = vmatpush1.msra.mxu0 0.0
      %217 = vmatprep.subr.mxu0 0.0
      %218 = vmatpush1.msra.mxu0 0.0
      %219 = vmatprep.subr.mxu0 0.0
      %220 = vmatpush1.msra.mxu0 0.0
      %221 = vmatprep.subr.mxu0 0.0
      %222 = vmatpush1.msra.mxu0 0.0
      %223 = vmatprep.subr.mxu0 0.0
      %224 = vmatpush1.msra.mxu0 0.0
      %225 = vmatprep.subr.mxu0 0.0
      %226 = vmatpush1.msra.mxu0 0.0
      %227 = vmatprep.subr.mxu0 0.0
      %228 = vmatpush1.msra.mxu0 0.0
      %229 = vmatprep.subr.mxu0 0.0
      %230 = vmatpush1.msra.mxu0 0.0
      %231 = vmatprep.subr.mxu0 0.0
      %232 = vmatpush1.msra.mxu0 0.0
      %233 = vmatprep.subr.mxu0 0.0
      %234 = vmatpush1.msra.mxu0 0.0
      %235 = vmatprep.subr.mxu0 0.0
      %236 = vmatpush1.msra.mxu0 0.0
      %237 = vmatprep.subr.mxu0 0.0
      %238 = vmatpush1.msra.mxu0 0.0
      %239 = vmatprep.subr.mxu0 0.0
      %240 = vmatpush1.msra.mxu0 0.0
      %241 = vmatprep.subr.mxu0 0.0
      %242 = vmatpush1.msra.mxu0 0.0
      %243 = vmatprep.subr.mxu0 0.0
      %244 = vmatpush1.msra.mxu0 0.0
      %245 = vmatprep.subr.mxu0 0.0
      %246 = vmatpush1.msra.mxu0 %v194
      %247 = vmatprep.subr.mxu0 0.0
      %248 = vmatpush2.msra.mxu0 0.0
      %249 = vmatprep.subr.mxu0 0.0
      %250 = vmatpush2.msra.mxu0 0.0
      %251 = vmatprep.subr.mxu0 0.0
      %252 = vmatpush2.msra.mxu0 0.0
      %253 = vmatprep.subr.mxu0 0.0
      %254 = vmatpush2.msra.mxu0 0.0
      %255 = vmatprep.subr.mxu0 0.0
      %256 = vmatpush2.msra.mxu0 0.0
      %257 = vmatprep.subr.mxu0 0.0
      %258 = vmatpush2.msra.mxu0 0.0
      %259 = vmatprep.subr.mxu0 0.0
      %260 = vmatpush2.msra.mxu0 0.0
      %261 = vmatprep.subr.mxu0 0.0
      %262 = vmatpush2.msra.mxu0 0.0
      %263 = vmatprep.subr.mxu0 0.0
      %264 = vmatpush2.msra.mxu0 0.0
      %265 = vmatprep.subr.mxu0 0.0
      %266 = vmatpush2.msra.mxu0 0.0
      %267 = vmatprep.subr.mxu0 0.0
      %268 = vmatpush2.msra.mxu0 0.0
      %269 = vmatprep.subr.mxu0 0.0
      %270 = vmatpush2.msra.mxu0 0.0
      %271 = vmatprep.subr.mxu0 0.0
      %272 = vmatpush2.msra.mxu0 0.0
      %273 = vmatprep.subr.mxu0 0.0
      %274 = vmatpush2.msra.mxu0 0.0
      %275 = vmatprep.subr.mxu0 0.0
      %276 = vmatpush2.msra.mxu0 0.0
      %277 = vmatprep.subr.mxu0 0.0
      %278 = vmatpush2.msra.mxu0 0.0
      %279 = vmatprep.mubr.f32.mxu0 0.0
      %280 = vmatmul.mubr.f32.gmra.mxu0 %v213
      %v281 = vpop.f32.mrf.mxu0
      %v282 = vadd.f32 0.0, %v281
      %v283 = vpop.f32.mrf.mxu0
      %284 = vdwg.mxu0
      %v285 = vlaneseq
      %v286 = vshrl.u32 %v285, 7
      %v287 = vlaneseq
      %v288 = vand.u32 %v287, 127
      %vm289 = vcmp.eq.s32.totalorder %v286, %v288
      %v290 = vsel %vm289, %v282, 0.0
      %vm291 = vcmask 27648
      %v292 = vsel %vm291, %v290, 0.0
      %293 = vadd.xlane.f32.xlu0 %v292
      %v294 = vpop.xlane.xlu0 %293
      %v295 = vrot.slane %v294, 4
      %v296 = vadd.f32 %v294, %v295
      %v297 = vrot.slane %v296, 2
      %v298 = vadd.f32 %v296, %v297
      %v299 = vrot.slane %v298, 1
      %v300 = vadd.f32 %v298, %v299
      %s301 = vtos %v300
      %v302 = vld [vmem:[#allocation2] sm:$0x1]
      %vm303 = vcmask 31744
      %v304 = vsel %vm303, %v210, 0.0
      %305 = vadd.xlane.f32.xlu0 %v304
      %v306 = vpop.xlane.xlu0 %305
      %v307 = vrot.slane %v306, 4
      %v308 = vadd.f32 %v306, %v307
      %v309 = vrot.slane %v308, 2
      %v310 = vadd.f32 %v308, %v309
      %v311 = vrot.slane %v310, 1
      %v312 = vadd.f32 %v310, %v311
      %s313 = vtos %v312
      %s314 = ssub.f32 %s313, %s301
      %v315 = vstv %s314
      %v316 = vadd.f32 %v302, %v315
      %vm317 = vcmask 0
      %318 = vst.msk [vmem:[#allocation2] sm:$0x1] %vm317, %v316
      // Predicated region
      $region33: #{tpu_custom_call.1} parent=27 // pred_check
        %p319 = pneg %p188
      $region34: #{tpu_custom_call.1} parent=27 // pred_check_branch
        %321 = sbr.rel (%p319) target = $region36
      $region35: #{tpu_custom_call.1} parent=27 // pred_region
        %v322 = vld [vmem:[#allocation2] sm:$0x1]
        %323 = vst.msk [vmem:[%s187] sm:$0x1] %vm317, %v322
      $region36: #{tpu_custom_call.1} parent=27 // pred_fallthru
        _
      %p324 = scmp.lt.s32.totalorder %s17, 1
      %s325 = scalar_select %p324, %s17, 1
      %s326 = scalar_lea.vmem %s2, %s325
      // Predicated region
      $region37: #{tpu_custom_call.1} parent=27 // pred_check
        %p327 = pneg %p99
      $region38: #{tpu_custom_call.1} parent=27 // pred_check_branch
        %329 = sbr.rel (%p327) target = $region40
      $region39: #{tpu_custom_call.1} parent=27 // pred_region
        _
      $region40: #{tpu_custom_call.1} parent=27 // pred_fallthru
        _
    $region28: #{tpu_custom_call.1} parent=5 // pred_fallthru
      _
    %p330 = scmp.le.s32.totalorder 2, %s8
    // Predicated region
    $region41: #{tpu_custom_call.1} parent=5 // pred_check
      %p331 = pneg %p330
    $region42: #{tpu_custom_call.1} parent=5 // pred_check_branch
      %333 = sbr.rel (%p331) target = $region44
    $region43: #{tpu_custom_call.1} parent=5 // pred_region
      %s334 = ssub.s32 %s8, 2
      // Predicated region
      $region45: #{tpu_custom_call.1} parent=43 // pred_check
        %p335 = pneg %p105
      $region46: #{tpu_custom_call.1} parent=43 // pred_check_branch
        %337 = sbr.rel (%p335) target = $region48
      $region47: #{tpu_custom_call.1} parent=43 // pred_region
        %p338 = scmp.lt.s32.totalorder %s19, 1
        %s339 = scalar_select %p338, %s19, 1
        %s340 = scalar_lea.vmem %s2, %s339
      $region48: #{tpu_custom_call.1} parent=43 // pred_fallthru
        _
    $region44: #{tpu_custom_call.1} parent=5 // pred_fallthru
      _
  $region6: #{tpu_custom_call.1} parent=0 // loop_footer
    %s12 = sadd.s32 1, %s8
  $region7: #{tpu_custom_call.1} parent=0 // loop_footer_branch
    %7 = sbr.rel target = $region3
  $region8: #{tpu_custom_call.1} parent=0 // loop_exit
    _

</llo_original>
